<compile_context>
chip_gen: v7x
topology: tpu7x:2x2x1
jax: 0.10.0
libtpu: 0.0.40
codegen_flags: <defaults>
</compile_context>

<pallas_src>
import functools

import jax
import jax.numpy as jnp
import numpy as np
from jax.experimental import pallas as pl
from jax.experimental.pallas import tpu as pltpu


# ---------------------------------------------------------------------------
# Kernels (pure slice copies — zero FLOPs)
# ---------------------------------------------------------------------------

def _shift_copy_kernel_nchw(x_ref, o_ref, *, K, P):
    # x_ref: VMEM (1, Ct, H, W)    — one channel tile of one batch image
    # o_ref: VMEM (N, 1, Ct, P, P) — all N shifted patches for this tile
    for p in range(K):                      # static unroll: N = K*K copies
        for q in range(K):
            o_ref[p * K + q, 0] = x_ref[0, :, p:p + P, q:q + P].astype(o_ref.dtype)


def _shift_copy_kernel_nhwc(x_ref, o_ref, *, K, P):
    # Channels-last: lane dim is Ct (multiple of 128) -> every load/store is a
    # full-lane vreg and the (p, q) shift is row/sublane slicing only.
    # x_ref: VMEM (1, H, W, Ct)
    # o_ref: VMEM (N, 1, P, P, Ct)
    for p in range(K):
        for q in range(K):
            o_ref[p * K + q, 0] = x_ref[0, p:p + P, q:q + P, :].astype(o_ref.dtype)


# ---------------------------------------------------------------------------
# Tile sizing helpers (padding- and generation-aware)
# ---------------------------------------------------------------------------

def _round_up(x, m):
    return (x + m - 1) // m * m


def _padded_block_bytes(block_shape, itemsize, sublane):
    """VMEM footprint of one block: minor dim -> 128 lanes, 2nd-minor -> sublane tile."""
    lead = 1
    for d in block_shape[:-2]:
        lead *= d
    return lead * _round_up(block_shape[-2], sublane) * _round_up(block_shape[-1], 128) * itemsize


def _vmem_budget_bytes():
    """(block budget, scoped vmem limit) derived from this generation's VMEM."""
    try:
        cap = int(pltpu.get_tpu_info().vmem_capacity_bytes)
    except Exception:
        cap = 64 << 20      # conservative fallback: smallest per-core VMEM (v7x)
    budget = int(cap * 0.70)                       # double-buffered in+out blocks
    limit = min(int(cap * 0.90), cap - (2 << 20))  # scoped-VMEM limit w/ headroom
    return budget, limit


# ---------------------------------------------------------------------------
# Forward wrappers
# ---------------------------------------------------------------------------

def _shift_forward_nchw(y, K, N, P, itemsize, sublane, budget, vmem_limit):
    B, C, H, W = y.shape

    # Largest channel tile whose padded, double-buffered in+out blocks fit.
    per_ct = 2 * (_padded_block_bytes((1, 1, H, W), itemsize, sublane)
                  + _padded_block_bytes((N, 1, 1, P, P), itemsize, sublane))
    ct = max(1, min(C, budget // per_ct))
    # Keep both v7x TensorCores busy (costs at most one extra cheap grid step).
    if B * pl.cdiv(C, ct) < 2 and C >= 2:
        ct = pl.cdiv(C, 2)

    kernel = functools.partial(_shift_copy_kernel_nchw, K=K, P=P)
    out = pl.pallas_call(
        kernel,
        grid=(B, pl.cdiv(C, ct)),
        in_specs=[pl.BlockSpec((1, ct, H, W), lambda b, c: (b, c, 0, 0))],
        out_specs=pl.BlockSpec((N, 1, ct, P, P), lambda b, c: (0, b, c, 0, 0)),
        out_shape=jax.ShapeDtypeStruct((N, B, C, P, P), y.dtype),
        compiler_params=pltpu.CompilerParams(
            dimension_semantics=("parallel", "parallel"),
            vmem_limit_bytes=int(vmem_limit)),
    )(y)
    # (N, B, C, P, P) -> (N*B, C, P, P): row-major, free; matches the PyTorch
    # conv -> transpose -> view ordering (shift-major, then batch).
    return out.reshape(N * B, C, P, P)


def _shift_forward_nhwc(y, K, N, P, itemsize, sublane, budget, vmem_limit):
    B, C, H, W = y.shape
    x = jnp.transpose(y, (0, 2, 3, 1))            # (B, H, W, C): channels on lanes

    def tile_bytes(ct):
        return 2 * (_padded_block_bytes((1, H, W, ct), itemsize, sublane)
                    + _padded_block_bytes((N, 1, P, P, ct), itemsize, sublane))

    # Channel tile is a multiple of 128 so stores stay full-lane dense.
    n128 = pl.cdiv(C, 128)
    k = 1
    while k < n128 and tile_bytes(128 * (k + 1)) <= budget:
        k += 1
    ct = 128 * k
    if B * pl.cdiv(C, ct) < 2 and n128 >= 2:      # both v7x cores, never < 128 lanes
        ct = 128 * pl.cdiv(n128, 2)

    kernel = functools.partial(_shift_copy_kernel_nhwc, K=K, P=P)
    out = pl.pallas_call(
        kernel,
        grid=(B, pl.cdiv(C, ct)),
        in_specs=[pl.BlockSpec((1, H, W, ct), lambda b, c: (b, 0, 0, c))],
        out_specs=pl.BlockSpec((N, 1, P, P, ct), lambda b, c: (0, b, 0, 0, c)),
        out_shape=jax.ShapeDtypeStruct((N, B, P, P, C), y.dtype),
        compiler_params=pltpu.CompilerParams(
            dimension_semantics=("parallel", "parallel"),
            vmem_limit_bytes=int(vmem_limit)),
    )(x)
    # (N, B, P, P, C) -> (N, B, C, P, P) -> (N*B, C, P, P).  The transpose is one
    # extra XLA pass over the output, paid for by full-128-lane stores inside the
    # kernel (the binding slot for this pure-copy kernel).
    return jnp.transpose(out, (0, 1, 4, 2, 3)).reshape(N * B, C, P, P)


def shift_forward(y: jnp.ndarray, shift_by_px: int, mode: str = "discrete",
                  channels_last_threshold: int = 128) -> jnp.ndarray:
    """Pallas implementation of Shift.forward (mode='discrete').

    Output matches the PyTorch module: shape (N*B, C, P, P) with shift-major
    ordering, where N = (2*shift_by_px+1)**2 and P = W - (2*shift_by_px+1) + 1.
    """
    B, C, H, W = y.shape
    K = 2 * shift_by_px + 1
    N = K * K
    P = W - K + 1
    # The PyTorch view() after the conv only round-trips for square inputs.
    assert H == W, "Shift.forward implicitly assumes square spatial dims"
    assert P >= 1, "spatial size must be >= kernel size (W >= 2*shift_by_px + 1)"

    if mode != "discrete":
        # TODO(synk): 'lanczos' mode needs lanczos_kernel() (not in provided source).
        raise NotImplementedError("only mode='discrete' is implemented")

    itemsize = jnp.dtype(y.dtype).itemsize
    sublane = max(1, 32 // itemsize)          # 8 f32 / 16 bf16 / 32 int8
    budget, vmem_limit = _vmem_budget_bytes()

    if C >= channels_last_threshold:
        return _shift_forward_nhwc(y, K, N, P, itemsize, sublane, budget, vmem_limit)
    return _shift_forward_nchw(y, K, N, P, itemsize, sublane, budget, vmem_limit)


def shift_forward_reference(y: jnp.ndarray, shift_by_px: int) -> jnp.ndarray:
    """Pure-JAX reference: conv with one-hot kernels == shifted slices."""
    B, C, H, W = y.shape
    K = 2 * shift_by_px + 1
    P = W - K + 1
    patches = []
    for dx in range(K):
        for dy in range(K):
            patches.append(y[:, :, dx:dx + P, dy:dy + P])
    return jnp.concatenate(patches, axis=0)                  # (N*B, C, P, P)


if __name__ == "__main__":
    shift_by_px = 1          # -> K = 3, N = 9

    # Small NCHW case (C < 128 -> NCHW kernel path).
    y = jax.random.normal(jax.random.PRNGKey(0), (2, 4, 16, 16), dtype=jnp.float32)
    out = jax.block_until_ready(shift_forward(y, shift_by_px))
    ref = shift_forward_reference(y, shift_by_px)
    assert out.shape == ref.shape, (out.shape, ref.shape)
    np.testing.assert_allclose(np.asarray(out), np.asarray(ref), rtol=0, atol=0)

    # Lane-dense channels-last path (C >= 128).
    y2 = jax.random.normal(jax.random.PRNGKey(0), (2, 128, 16, 16), dtype=jnp.float32)
    out2 = jax.block_until_ready(shift_forward(y2, shift_by_px))
    ref2 = shift_forward_reference(y2, shift_by_px)
    assert out2.shape == ref2.shape, (out2.shape, ref2.shape)
    np.testing.assert_allclose(np.asarray(out2), np.asarray(ref2), rtol=0, atol=0)

    print("KERNEL_OK")
</pallas_src>

<mosaic_0001>
module attributes {stable_mosaic.version = 11 : i64} {
  func.func @_shift_copy_kernel_nchw(%arg0: i32, %arg1: i32, %arg2: memref<1x4x16x16xf32, #tpu.memory_space<vmem>>, %arg3: memref<9x1x4x14x14xf32, #tpu.memory_space<vmem>>) attributes {dimension_semantics = [#tpu.dimension_semantics<parallel>, #tpu.dimension_semantics<parallel>], iteration_bounds = array<i64: 2, 1>, scalar_prefetch = 0 : i64, scratch_operands = 0 : i64, tpu.core_type = #tpu.core_type<tc>, window_params = [{transform_indices = @transform_0, window_bounds = array<i64: 1, 4, 16, 16>}, {transform_indices = @transform_1, window_bounds = array<i64: 9, 1, 4, 14, 14>}]} {
    %c0 = arith.constant 0 : index
    %c0_0 = arith.constant 0 : index
    %c0_1 = arith.constant 0 : index
    %c0_2 = arith.constant 0 : index
    %0 = vector.load %arg2[%c0, %c0_0, %c0_1, %c0_2] : memref<1x4x16x16xf32, #tpu.memory_space<vmem>>, vector<1x4x14x14xf32>
    %1 = vector.shape_cast %0 : vector<1x4x14x14xf32> to vector<4x14x14xf32>
    %c0_3 = arith.constant 0 : index
    %c0_4 = arith.constant 0 : index
    %c0_5 = arith.constant 0 : index
    %c0_6 = arith.constant 0 : index
    %c0_7 = arith.constant 0 : index
    %2 = vector.load %arg3[%c0_3, %c0_4, %c0_5, %c0_6, %c0_7] : memref<9x1x4x14x14xf32, #tpu.memory_space<vmem>>, vector<1x1x4x14x14xf32>
    %3 = vector.shape_cast %2 : vector<1x1x4x14x14xf32> to vector<4x14x14xf32>
    %4 = vector.shape_cast %1 : vector<4x14x14xf32> to vector<1x1x4x14x14xf32>
    tpu.vector_store %arg3[%c0_3, %c0_4, %c0_5, %c0_6, %c0_7], %4 {strides = array<i32>} : memref<9x1x4x14x14xf32, #tpu.memory_space<vmem>>, vector<1x1x4x14x14xf32>,
    %c0_8 = arith.constant 0 : index
    %c0_9 = arith.constant 0 : index
    %c0_10 = arith.constant 0 : index
    %c1 = arith.constant 1 : index
    %5 = vector.load %arg2[%c0_8, %c0_9, %c0_10, %c1] : memref<1x4x16x16xf32, #tpu.memory_space<vmem>>, vector<1x4x14x14xf32>
    %6 = vector.shape_cast %5 : vector<1x4x14x14xf32> to vector<4x14x14xf32>
    %c1_11 = arith.constant 1 : index
    %c0_12 = arith.constant 0 : index
    %c0_13 = arith.constant 0 : index
    %c0_14 = arith.constant 0 : index
    %c0_15 = arith.constant 0 : index
    %7 = vector.load %arg3[%c1_11, %c0_12, %c0_13, %c0_14, %c0_15] : memref<9x1x4x14x14xf32, #tpu.memory_space<vmem>>, vector<1x1x4x14x14xf32>
    %8 = vector.shape_cast %7 : vector<1x1x4x14x14xf32> to vector<4x14x14xf32>
    %9 = vector.shape_cast %6 : vector<4x14x14xf32> to vector<1x1x4x14x14xf32>
    tpu.vector_store %arg3[%c1_11, %c0_12, %c0_13, %c0_14, %c0_15], %9 {strides = array<i32>} : memref<9x1x4x14x14xf32, #tpu.memory_space<vmem>>, vector<1x1x4x14x14xf32>,
    %c0_16 = arith.constant 0 : index
    %c0_17 = arith.constant 0 : index
    %c0_18 = arith.constant 0 : index
    %c2 = arith.constant 2 : index
    %10 = vector.load %arg2[%c0_16, %c0_17, %c0_18, %c2] : memref<1x4x16x16xf32, #tpu.memory_space<vmem>>, vector<1x4x14x14xf32>
    %11 = vector.shape_cast %10 : vector<1x4x14x14xf32> to vector<4x14x14xf32>
    %c2_19 = arith.constant 2 : index
    %c0_20 = arith.constant 0 : index
    %c0_21 = arith.constant 0 : index
    %c0_22 = arith.constant 0 : index
    %c0_23 = arith.constant 0 : index
    %12 = vector.load %arg3[%c2_19, %c0_20, %c0_21, %c0_22, %c0_23] : memref<9x1x4x14x14xf32, #tpu.memory_space<vmem>>, vector<1x1x4x14x14xf32>
    %13 = vector.shape_cast %12 : vector<1x1x4x14x14xf32> to vector<4x14x14xf32>
    %14 = vector.shape_cast %11 : vector<4x14x14xf32> to vector<1x1x4x14x14xf32>
    tpu.vector_store %arg3[%c2_19, %c0_20, %c0_21, %c0_22, %c0_23], %14 {strides = array<i32>} : memref<9x1x4x14x14xf32, #tpu.memory_space<vmem>>, vector<1x1x4x14x14xf32>,
    %c0_24 = arith.constant 0 : index
    %c0_25 = arith.constant 0 : index
    %c1_26 = arith.constant 1 : index
    %c0_27 = arith.constant 0 : index
    %15 = vector.load %arg2[%c0_24, %c0_25, %c1_26, %c0_27] : memref<1x4x16x16xf32, #tpu.memory_space<vmem>>, vector<1x4x14x14xf32>
    %16 = vector.shape_cast %15 : vector<1x4x14x14xf32> to vector<4x14x14xf32>
    %c3 = arith.constant 3 : index
    %c0_28 = arith.constant 0 : index
    %c0_29 = arith.constant 0 : index
    %c0_30 = arith.constant 0 : index
    %c0_31 = arith.constant 0 : index
    %17 = vector.load %arg3[%c3, %c0_28, %c0_29, %c0_30, %c0_31] : memref<9x1x4x14x14xf32, #tpu.memory_space<vmem>>, vector<1x1x4x14x14xf32>
    %18 = vector.shape_cast %17 : vector<1x1x4x14x14xf32> to vector<4x14x14xf32>
    %19 = vector.shape_cast %16 : vector<4x14x14xf32> to vector<1x1x4x14x14xf32>
    tpu.vector_store %arg3[%c3, %c0_28, %c0_29, %c0_30, %c0_31], %19 {strides = array<i32>} : memref<9x1x4x14x14xf32, #tpu.memory_space<vmem>>, vector<1x1x4x14x14xf32>,
    %c0_32 = arith.constant 0 : index
    %c0_33 = arith.constant 0 : index
    %c1_34 = arith.constant 1 : index
    %c1_35 = arith.constant 1 : index
    %20 = vector.load %arg2[%c0_32, %c0_33, %c1_34, %c1_35] : memref<1x4x16x16xf32, #tpu.memory_space<vmem>>, vector<1x4x14x14xf32>
    %21 = vector.shape_cast %20 : vector<1x4x14x14xf32> to vector<4x14x14xf32>
    %c4 = arith.constant 4 : index
    %c0_36 = arith.constant 0 : index
    %c0_37 = arith.constant 0 : index
    %c0_38 = arith.constant 0 : index
    %c0_39 = arith.constant 0 : index
    %22 = vector.load %arg3[%c4, %c0_36, %c0_37, %c0_38, %c0_39] : memref<9x1x4x14x14xf32, #tpu.memory_space<vmem>>, vector<1x1x4x14x14xf32>
    %23 = vector.shape_cast %22 : vector<1x1x4x14x14xf32> to vector<4x14x14xf32>
    %24 = vector.shape_cast %21 : vector<4x14x14xf32> to vector<1x1x4x14x14xf32>
    tpu.vector_store %arg3[%c4, %c0_36, %c0_37, %c0_38, %c0_39], %24 {strides = array<i32>} : memref<9x1x4x14x14xf32, #tpu.memory_space<vmem>>, vector<1x1x4x14x14xf32>,
    %c0_40 = arith.constant 0 : index
    %c0_41 = arith.constant 0 : index
    %c1_42 = arith.constant 1 : index
    %c2_43 = arith.constant 2 : index
    %25 = vector.load %arg2[%c0_40, %c0_41, %c1_42, %c2_43] : memref<1x4x16x16xf32, #tpu.memory_space<vmem>>, vector<1x4x14x14xf32>
    %26 = vector.shape_cast %25 : vector<1x4x14x14xf32> to vector<4x14x14xf32>
    %c5 = arith.constant 5 : index
    %c0_44 = arith.constant 0 : index
    %c0_45 = arith.constant 0 : index
    %c0_46 = arith.constant 0 : index
    %c0_47 = arith.constant 0 : index
    %27 = vector.load %arg3[%c5, %c0_44, %c0_45, %c0_46, %c0_47] : memref<9x1x4x14x14xf32, #tpu.memory_space<vmem>>, vector<1x1x4x14x14xf32>
    %28 = vector.shape_cast %27 : vector<1x1x4x14x14xf32> to vector<4x14x14xf32>
    %29 = vector.shape_cast %26 : vector<4x14x14xf32> to vector<1x1x4x14x14xf32>
    tpu.vector_store %arg3[%c5, %c0_44, %c0_45, %c0_46, %c0_47], %29 {strides = array<i32>} : memref<9x1x4x14x14xf32, #tpu.memory_space<vmem>>, vector<1x1x4x14x14xf32>,
    %c0_48 = arith.constant 0 : index
    %c0_49 = arith.constant 0 : index
    %c2_50 = arith.constant 2 : index
    %c0_51 = arith.constant 0 : index
    %30 = vector.load %arg2[%c0_48, %c0_49, %c2_50, %c0_51] : memref<1x4x16x16xf32, #tpu.memory_space<vmem>>, vector<1x4x14x14xf32>
    %31 = vector.shape_cast %30 : vector<1x4x14x14xf32> to vector<4x14x14xf32>
    %c6 = arith.constant 6 : index
    %c0_52 = arith.constant 0 : index
    %c0_53 = arith.constant 0 : index
    %c0_54 = arith.constant 0 : index
    %c0_55 = arith.constant 0 : index
    %32 = vector.load %arg3[%c6, %c0_52, %c0_53, %c0_54, %c0_55] : memref<9x1x4x14x14xf32, #tpu.memory_space<vmem>>, vector<1x1x4x14x14xf32>
    %33 = vector.shape_cast %32 : vector<1x1x4x14x14xf32> to vector<4x14x14xf32>
    %34 = vector.shape_cast %31 : vector<4x14x14xf32> to vector<1x1x4x14x14xf32>
    tpu.vector_store %arg3[%c6, %c0_52, %c0_53, %c0_54, %c0_55], %34 {strides = array<i32>} : memref<9x1x4x14x14xf32, #tpu.memory_space<vmem>>, vector<1x1x4x14x14xf32>,
    %c0_56 = arith.constant 0 : index
    %c0_57 = arith.constant 0 : index
    %c2_58 = arith.constant 2 : index
    %c1_59 = arith.constant 1 : index
    %35 = vector.load %arg2[%c0_56, %c0_57, %c2_58, %c1_59] : memref<1x4x16x16xf32, #tpu.memory_space<vmem>>, vector<1x4x14x14xf32>
    %36 = vector.shape_cast %35 : vector<1x4x14x14xf32> to vector<4x14x14xf32>
    %c7 = arith.constant 7 : index
    %c0_60 = arith.constant 0 : index
    %c0_61 = arith.constant 0 : index
    %c0_62 = arith.constant 0 : index
    %c0_63 = arith.constant 0 : index
    %37 = vector.load %arg3[%c7, %c0_60, %c0_61, %c0_62, %c0_63] : memref<9x1x4x14x14xf32, #tpu.memory_space<vmem>>, vector<1x1x4x14x14xf32>
    %38 = vector.shape_cast %37 : vector<1x1x4x14x14xf32> to vector<4x14x14xf32>
    %39 = vector.shape_cast %36 : vector<4x14x14xf32> to vector<1x1x4x14x14xf32>
    tpu.vector_store %arg3[%c7, %c0_60, %c0_61, %c0_62, %c0_63], %39 {strides = array<i32>} : memref<9x1x4x14x14xf32, #tpu.memory_space<vmem>>, vector<1x1x4x14x14xf32>,
    %c0_64 = arith.constant 0 : index
    %c0_65 = arith.constant 0 : index
    %c2_66 = arith.constant 2 : index
    %c2_67 = arith.constant 2 : index
    %40 = vector.load %arg2[%c0_64, %c0_65, %c2_66, %c2_67] : memref<1x4x16x16xf32, #tpu.memory_space<vmem>>, vector<1x4x14x14xf32>
    %41 = vector.shape_cast %40 : vector<1x4x14x14xf32> to vector<4x14x14xf32>
    %c8 = arith.constant 8 : index
    %c0_68 = arith.constant 0 : index
    %c0_69 = arith.constant 0 : index
    %c0_70 = arith.constant 0 : index
    %c0_71 = arith.constant 0 : index
    %42 = vector.load %arg3[%c8, %c0_68, %c0_69, %c0_70, %c0_71] : memref<9x1x4x14x14xf32, #tpu.memory_space<vmem>>, vector<1x1x4x14x14xf32>
    %43 = vector.shape_cast %42 : vector<1x1x4x14x14xf32> to vector<4x14x14xf32>
    %44 = vector.shape_cast %41 : vector<4x14x14xf32> to vector<1x1x4x14x14xf32>
    tpu.vector_store %arg3[%c8, %c0_68, %c0_69, %c0_70, %c0_71], %44 {strides = array<i32>} : memref<9x1x4x14x14xf32, #tpu.memory_space<vmem>>, vector<1x1x4x14x14xf32>,
    return
  }
  func.func @transform_0(%arg0: i32, %arg1: i32) -> (i32, i32, i32, i32) {
    %c0_i32 = arith.constant 0 : i32
    %c0_i32_0 = arith.constant 0 : i32
    %c0_i32_1 = arith.constant 0 : i32
    return %arg0, %arg1, %c0_i32, %c0_i32_0 : i32, i32, i32, i32
  }
  func.func @transform_1(%arg0: i32, %arg1: i32) -> (i32, i32, i32, i32, i32) {
    %c0_i32 = arith.constant 0 : i32
    %c0_i32_0 = arith.constant 0 : i32
    %c0_i32_1 = arith.constant 0 : i32
    %c0_i32_2 = arith.constant 0 : i32
    return %c0_i32, %arg0, %arg1, %c0_i32_0, %c0_i32_1 : i32, i32, i32, i32, i32
  }
}

</mosaic_0001>

<llo_original>
// kernel: tpu_custom_call.1
$region0: #{tpu_custom_call.1}
  #allocation0 [shape = 'u32[]', space=smem, size = 0x4, offset = 0x4, fixed_abs, tag = 'smem constant byte address 0x4 - core index']
  #allocation1 [shape = 'u32[144,128]{1,0:T(1,128)}', space=vmem, size = 0x12000, scoped, tag = 'internal scratch']
  %s0 = inlined_call_operand.hbm [shape: f32[2,4,16,16], index: 0, kind: input, shape index: {}]
  %s1 = inlined_call_operand.vmem [shape: f32[9,2,4,14,14], index: 1, kind: output, shape index: {}]
  %s2 = sld [smem:[#allocation0]]
  $region75: #{tpu_custom_call.1} parent=0
    _
  %s4 = ssub.s32 1, %s2
  %s5 = scalar_select 0, %s4, %s2
  $region1: #{tpu_custom_call.1} parent=0
    #allocation2 [shape = 'u8[65536]{0}', space=vmem, size = 0x10000, scoped, tag = 'input window, operand 0']
    #allocation3 [shape = 's32[2]{0}', space=sflag, size = 0x8, scoped, tag = 'scoped memory for tpu_custom_call.1']
    #allocation4 [shape = 'u8[589824]{0}', space=vmem, size = 0x90000, scoped, tag = 'output window, operand 0']
    %6 = vsyncpa [#allocation3], 0
    %s7 = scalar_lea.sflag [#allocation3], 1
    %8 = vsyncpa %s7, 0
    loop: start=0, step=1, limit=4
    $region2: #{tpu_custom_call.1} parent=1 // loop_pre_header
      _
    $region3: #{tpu_custom_call.1} parent=1 // loop_header
      %s10 = sphi 0, %s14
      %p11 = scmp.ge.s32.totalorder %s10, 4
      %s17 = sphi 0, %s29
      %s18 = sphi 0, %s25
      %s19 = sphi 0, %s17
      %s20 = sphi 0, %s18
      %s21 = sphi 0, %s19
      %s22 = sphi 0, %s20
      %s34 = sphi 0, %s36
      %s37 = sphi 0, %s34
      %s38 = sphi 0, %s37
      %s54 = sphi 0, %s38
      %s62 = sphi 0, %s64
      %s65 = sphi 0, %s62
      %s66 = sphi 0, %s65
      %s82 = sphi 0, %s66
    $region4: #{tpu_custom_call.1} parent=1 // loop_header_branch
      %13 = sbr.rel (%p11) target = $region8
    $region5: #{tpu_custom_call.1} parent=1 // loop_body
      %s15 = ssub.s32 %s10, 1
      %s16 = ssub.s32 %s10, 2
      %s23 = sadd.s32 1, %s18
      %p24 = scmp.ge.s32.totalorder %s23, 1
      %s25 = scalar_select %p24, 0, %s23
      %s26 = sadd.s32 1, %s17
      %s27 = scalar_select %p24, %s26, %s17
      %p28 = scmp.ge.s32.totalorder %s27, 2
      %s29 = scalar_select %p28, 0, %s27
      %s30 = ssub.s32 %s17, %s29
      %s31 = ssub.s32 %s18, %s25
      %s32 = sor.u32 %s30, %s31
      %p33 = scmp.eq.s32.totalorder %s32, 0
      %s35 = sadd.s32 %s34, 1
      %s36 = scalar_select %p33, %s34, %s35
      %p39 = pneg %p33
      %p40 = scmp.eq.s32.totalorder %s10, 1
      %p41 = por %p39, %p40
      %p42 = scmp.ne.s32.totalorder %s34, %s37
      %p43 = scmp.eq.s32.totalorder %s10, 0
      %p44 = por %p42, %p43
      %p45 = scmp.ne.s32.totalorder %s34, %s37
      %p46 = scmp.eq.s32.totalorder %s15, 1
      %p47 = por %p45, %p46
      %p48 = scmp.ne.s32.totalorder %s37, %s38
      %p49 = scmp.eq.s32.totalorder %s15, 0
      %p50 = por %p48, %p49
      %p51 = scmp.ne.s32.totalorder %s37, %s38
      %p52 = scmp.eq.s32.totalorder %s16, 1
      %p53 = por %p51, %p52
      %p55 = scmp.ne.s32.totalorder %s38, %s54
      %p56 = scmp.eq.s32.totalorder %s16, 0
      %p57 = por %p55, %p56
      %s58 = ssub.s32 %s17, %s29
      %s59 = ssub.s32 %s18, %s25
      %s60 = sor.u32 %s58, %s59
      %p61 = scmp.eq.s32.totalorder %s60, 0
      %s63 = sadd.s32 %s62, 1
      %s64 = scalar_select %p61, %s62, %s63
      %p67 = pneg %p61
      %p68 = scmp.eq.s32.totalorder %s10, 1
      %p69 = por %p67, %p68
      %p70 = scmp.ne.s32.totalorder %s62, %s65
      %p71 = scmp.eq.s32.totalorder %s10, 0
      %p72 = por %p70, %p71
      %p73 = scmp.ne.s32.totalorder %s62, %s65
      %p74 = scmp.eq.s32.totalorder %s15, 1
      %p75 = por %p73, %p74
      %p76 = scmp.ne.s32.totalorder %s65, %s66
      %p77 = scmp.eq.s32.totalorder %s15, 0
      %p78 = por %p76, %p77
      %p79 = scmp.ne.s32.totalorder %s65, %s66
      %p80 = scmp.eq.s32.totalorder %s16, 1
      %p81 = por %p79, %p80
      %p83 = scmp.ne.s32.totalorder %s66, %s82
      %p84 = scmp.eq.s32.totalorder %s16, 0
      %p85 = por %p83, %p84
      %p86 = scmp.le.s32.totalorder 1, %s10
      %p87 = scmp.lt.s32.totalorder %s10, 3
      %p88 = pnand %p86, %p87
      %p89 = pneg %p88
      // Predicated region
      $region9: #{tpu_custom_call.1} parent=5 // pred_check
        _
      $region10: #{tpu_custom_call.1} parent=5 // pred_check_branch
        %91 = sbr.rel (%p88) target = $region12
      $region11: #{tpu_custom_call.1} parent=5 // pred_region
        %s92 = ssub.s32 %s10, 1
      $region12: #{tpu_custom_call.1} parent=5 // pred_fallthru
        _
      %p93 = scmp.lt.s32.totalorder %s10, 2
      // Predicated region
      $region13: #{tpu_custom_call.1} parent=5 // pred_check
        %p94 = pneg %p93
      $region14: #{tpu_custom_call.1} parent=5 // pred_check_branch
        %96 = sbr.rel (%p94) target = $region16
      $region15: #{tpu_custom_call.1} parent=5 // pred_region
        // Predicated region
        $region17: #{tpu_custom_call.1} parent=15 // pred_check
          %p97 = pneg %p44
        $region18: #{tpu_custom_call.1} parent=15 // pred_check_branch
          %99 = sbr.rel (%p97) target = $region20
        $region19: #{tpu_custom_call.1} parent=15 // pred_region
          %s100 = sand.u32 %s34, 1
          %s101 = scalar_lea.sflag [#allocation3], %s100
          %s102 = sand.u32 %s34, 1
          %s103 = smul.addr %s102, 64
          %s104 = scalar_lea.vmem [#allocation2], %s103
          %s105 = smul.u32 4, %s18
          %s107 = ssub.s32 1024, 1024
          %108 = vsyncadd %s101, %s107
          %s109 = smul.addr %s105, 2
          %s110 = smul.addr %s17, 8
          %s111 = sadd.s32 %s109, %s110
          %s112 = smul.addr %s111, 128
          %s113 = scalar_lea.hbm %s0, %s112
          %s114 = sshll.u32 %s104, 4
          %s115 = int_to_ptr.vmem [resolvable:$true] %s114
          %120 = dma.hbm_to_vmem [thread:$0]  %s113, 1024, %s115, %s101, 128, 128, 8
        $region20: #{tpu_custom_call.1} parent=15 // pred_fallthru
          _
      $region16: #{tpu_custom_call.1} parent=5 // pred_fallthru
        _
      %p121 = scmp.le.s32.totalorder 1, %s10
      %p122 = scmp.lt.s32.totalorder %s10, 3
      %p123 = pnand %p121, %p122
      %p124 = pneg %p123
      // Predicated region
      $region21: #{tpu_custom_call.1} parent=5 // pred_check
        _
      $region22: #{tpu_custom_call.1} parent=5 // pred_check_branch
        %126 = sbr.rel (%p123) target = $region24
      $region23: #{tpu_custom_call.1} parent=5 // pred_region
        %s127 = ssub.s32 %s10, 1
        %s128 = sand.u32 %s37, 1
        %s129 = scalar_lea.sflag [#allocation3], %s128
        %s130 = sand.u32 %s37, 1
        %s131 = smul.addr %s130, 64
        %s132 = scalar_lea.vmem [#allocation2], %s131
        // Predicated region
        $region25: #{tpu_custom_call.1} parent=23 // pred_check
          %p133 = pneg %p50
        $region26: #{tpu_custom_call.1} parent=23 // pred_check_branch
          %135 = sbr.rel (%p133) target = $region28
        $region27: #{tpu_custom_call.1} parent=23 // pred_region
          %136 = dma.done %s129, 1024
        $region28: #{tpu_custom_call.1} parent=23 // pred_fallthru
          _
        %s137 = sand.u32 %s37, 1
        %s138 = scalar_lea.sflag [#allocation3], %s137
        %s139 = sand.u32 %s37, 1
        %s140 = smul.addr %s139, 64
        %s141 = scalar_lea.vmem [#allocation2], %s140
        %p142 = pneg %p50
        %p143 = pneg %p47
        %p144 = pneg %p78
        %p145 = pneg %p75
        %s146 = sand.u32 %s65, 1
        %s147 = sand.u32 %s65, 1
        %s148 = smul.addr %s147, 576
        %s149 = scalar_lea.vmem [#allocation4], %s148
        %s150 = smul.u32 4, %s20
        %s151 = smul.u32 4, %s20
        %v152 = vld [vmem:[%s132] sm:$0xff]
        %v153 = vld [vmem:[%s132 + $0x8] sm:$0x3f]
        %v154 = vld [vmem:[%s132 + $0x10] sm:$0xff]
        %v155 = vld [vmem:[%s132 + $0x18] sm:$0x3f]
        %v156 = vld [vmem:[%s132 + $0x20] sm:$0xff]
        %v157 = vld [vmem:[%s132 + $0x28] sm:$0x3f]
        %v158 = vld [vmem:[%s132 + $0x30] sm:$0xff]
        %v159 = vld [vmem:[%s132 + $0x38] sm:$0x3f]
        %vm160 = vcmask 113664
        %161 = vst.msk [vmem:[%s149] sm:$0xff] %vm160, %v152
        %vm162 = vcmask 111616
        %163 = vst.msk [vmem:[%s149 + $0x8] sm:$0x3f] %vm162, %v153
        %164 = vst.msk [vmem:[%s149 + $0x10] sm:$0xff] %vm160, %v154
        %165 = vst.msk [vmem:[%s149 + $0x18] sm:$0x3f] %vm162, %v155
        %166 = vst.msk [vmem:[%s149 + $0x20] sm:$0xff] %vm160, %v156
        %167 = vst.msk [vmem:[%s149 + $0x28] sm:$0x3f] %vm162, %v157
        %168 = vst.msk [vmem:[%s149 + $0x30] sm:$0xff] %vm160, %v158
        %169 = vst.msk [vmem:[%s149 + $0x38] sm:$0x3f] %vm162, %v159
        %v170 = vld [vmem:[%s132] sm:$0xff]
        %v171 = vld [vmem:[%s132 + $0x8] sm:$0x3f]
        %v172 = vld [vmem:[%s132 + $0x10] sm:$0xff]
        %v173 = vld [vmem:[%s132 + $0x18] sm:$0x3f]
        %v174 = vld [vmem:[%s132 + $0x20] sm:$0xff]
        %v175 = vld [vmem:[%s132 + $0x28] sm:$0x3f]
        %v176 = vld [vmem:[%s132 + $0x30] sm:$0xff]
        %v177 = vld [vmem:[%s132 + $0x38] sm:$0x3f]
        %186 = vrot.lane.b32.xlu0 %v170, 127
        %v187 = vpop.permute.xlu0 %186
        %188 = vrot.lane.b32.xlu0 %v171, 127
        %v189 = vpop.permute.xlu0 %188
        %190 = vrot.lane.b32.xlu0 %v172, 127
        %v191 = vpop.permute.xlu0 %190
        %192 = vrot.lane.b32.xlu0 %v173, 127
        %v193 = vpop.permute.xlu0 %192
        %194 = vrot.lane.b32.xlu0 %v174, 127
        %v195 = vpop.permute.xlu0 %194
        %196 = vrot.lane.b32.xlu0 %v175, 127
        %v197 = vpop.permute.xlu0 %196
        %198 = vrot.lane.b32.xlu0 %v176, 127
        %v199 = vpop.permute.xlu0 %198
        %200 = vrot.lane.b32.xlu0 %v177, 127
        %v201 = vpop.permute.xlu0 %200
        %s210 = scalar_lea.vmem %s149, 64 [#allocation4]
        %211 = vst.msk [vmem:[%s210] sm:$0xff] %vm160, %v187
        %212 = vst.msk [vmem:[%s210 + $0x8] sm:$0x3f] %vm162, %v189
        %213 = vst.msk [vmem:[%s210 + $0x10] sm:$0xff] %vm160, %v191
        %214 = vst.msk [vmem:[%s210 + $0x18] sm:$0x3f] %vm162, %v193
        %215 = vst.msk [vmem:[%s210 + $0x20] sm:$0xff] %vm160, %v195
        %216 = vst.msk [vmem:[%s210 + $0x28] sm:$0x3f] %vm162, %v197
        %217 = vst.msk [vmem:[%s210 + $0x30] sm:$0xff] %vm160, %v199
        %218 = vst.msk [vmem:[%s210 + $0x38] sm:$0x3f] %vm162, %v201
        %v219 = vld [vmem:[%s132] sm:$0xff]
        %v220 = vld [vmem:[%s132 + $0x8] sm:$0x3f]
        %v221 = vld [vmem:[%s132 + $0x10] sm:$0xff]
        %v222 = vld [vmem:[%s132 + $0x18] sm:$0x3f]
        %v223 = vld [vmem:[%s132 + $0x20] sm:$0xff]
        %v224 = vld [vmem:[%s132 + $0x28] sm:$0x3f]
        %v225 = vld [vmem:[%s132 + $0x30] sm:$0xff]
        %v226 = vld [vmem:[%s132 + $0x38] sm:$0x3f]
        %235 = vrot.lane.b32.xlu0 %v219, 126
        %v236 = vpop.permute.xlu0 %235
        %237 = vrot.lane.b32.xlu0 %v220, 126
        %v238 = vpop.permute.xlu0 %237
        %239 = vrot.lane.b32.xlu0 %v221, 126
        %v240 = vpop.permute.xlu0 %239
        %241 = vrot.lane.b32.xlu0 %v222, 126
        %v242 = vpop.permute.xlu0 %241
        %243 = vrot.lane.b32.xlu0 %v223, 126
        %v244 = vpop.permute.xlu0 %243
        %245 = vrot.lane.b32.xlu0 %v224, 126
        %v246 = vpop.permute.xlu0 %245
        %247 = vrot.lane.b32.xlu0 %v225, 126
        %v248 = vpop.permute.xlu0 %247
        %249 = vrot.lane.b32.xlu0 %v226, 126
        %v250 = vpop.permute.xlu0 %249
        %s259 = scalar_lea.vmem %s149, 128 [#allocation4]
        %260 = vst.msk [vmem:[%s259] sm:$0xff] %vm160, %v236
        %261 = vst.msk [vmem:[%s259 + $0x8] sm:$0x3f] %vm162, %v238
        %262 = vst.msk [vmem:[%s259 + $0x10] sm:$0xff] %vm160, %v240
        %263 = vst.msk [vmem:[%s259 + $0x18] sm:$0x3f] %vm162, %v242
        %264 = vst.msk [vmem:[%s259 + $0x20] sm:$0xff] %vm160, %v244
        %265 = vst.msk [vmem:[%s259 + $0x28] sm:$0x3f] %vm162, %v246
        %266 = vst.msk [vmem:[%s259 + $0x30] sm:$0xff] %vm160, %v248
        %267 = vst.msk [vmem:[%s259 + $0x38] sm:$0x3f] %vm162, %v250
        %v268 = vld [vmem:[%s132 + $0x1] sm:$0xff]
        %v269 = vld [vmem:[%s132 + $0x9] sm:$0x3f]
        %v270 = vld [vmem:[%s132 + $0x11] sm:$0xff]
        %v271 = vld [vmem:[%s132 + $0x19] sm:$0x3f]
        %v272 = vld [vmem:[%s132 + $0x21] sm:$0xff]
        %v273 = vld [vmem:[%s132 + $0x29] sm:$0x3f]
        %v274 = vld [vmem:[%s132 + $0x31] sm:$0xff]
        %v275 = vld [vmem:[%s132 + $0x39] sm:$0x3f]
        %s276 = scalar_lea.vmem %s149, 192 [#allocation4]
        %277 = vst.msk [vmem:[%s276] sm:$0xff] %vm160, %v268
        %278 = vst.msk [vmem:[%s276 + $0x8] sm:$0x3f] %vm162, %v269
        %279 = vst.msk [vmem:[%s276 + $0x10] sm:$0xff] %vm160, %v270
        %280 = vst.msk [vmem:[%s276 + $0x18] sm:$0x3f] %vm162, %v271
        %281 = vst.msk [vmem:[%s276 + $0x20] sm:$0xff] %vm160, %v272
        %282 = vst.msk [vmem:[%s276 + $0x28] sm:$0x3f] %vm162, %v273
        %283 = vst.msk [vmem:[%s276 + $0x30] sm:$0xff] %vm160, %v274
        %284 = vst.msk [vmem:[%s276 + $0x38] sm:$0x3f] %vm162, %v275
        %v285 = vld [vmem:[%s132 + $0x1] sm:$0xff]
        %v286 = vld [vmem:[%s132 + $0x9] sm:$0x3f]
        %v287 = vld [vmem:[%s132 + $0x11] sm:$0xff]
        %v288 = vld [vmem:[%s132 + $0x19] sm:$0x3f]
        %v289 = vld [vmem:[%s132 + $0x21] sm:$0xff]
        %v290 = vld [vmem:[%s132 + $0x29] sm:$0x3f]
        %v291 = vld [vmem:[%s132 + $0x31] sm:$0xff]
        %v292 = vld [vmem:[%s132 + $0x39] sm:$0x3f]
        %301 = vrot.lane.b32.xlu0 %v285, 127
        %v302 = vpop.permute.xlu0 %301
        %303 = vrot.lane.b32.xlu0 %v286, 127
        %v304 = vpop.permute.xlu0 %303
        %305 = vrot.lane.b32.xlu0 %v287, 127
        %v306 = vpop.permute.xlu0 %305
        %307 = vrot.lane.b32.xlu0 %v288, 127
        %v308 = vpop.permute.xlu0 %307
        %309 = vrot.lane.b32.xlu0 %v289, 127
        %v310 = vpop.permute.xlu0 %309
        %311 = vrot.lane.b32.xlu0 %v290, 127
        %v312 = vpop.permute.xlu0 %311
        %313 = vrot.lane.b32.xlu0 %v291, 127
        %v314 = vpop.permute.xlu0 %313
        %315 = vrot.lane.b32.xlu0 %v292, 127
        %v316 = vpop.permute.xlu0 %315
        %s325 = scalar_lea.vmem %s149, 256 [#allocation4]
        %326 = vst.msk [vmem:[%s325] sm:$0xff] %vm160, %v302
        %327 = vst.msk [vmem:[%s325 + $0x8] sm:$0x3f] %vm162, %v304
        %328 = vst.msk [vmem:[%s325 + $0x10] sm:$0xff] %vm160, %v306
        %329 = vst.msk [vmem:[%s325 + $0x18] sm:$0x3f] %vm162, %v308
        %330 = vst.msk [vmem:[%s325 + $0x20] sm:$0xff] %vm160, %v310
        %331 = vst.msk [vmem:[%s325 + $0x28] sm:$0x3f] %vm162, %v312
        %332 = vst.msk [vmem:[%s325 + $0x30] sm:$0xff] %vm160, %v314
        %333 = vst.msk [vmem:[%s325 + $0x38] sm:$0x3f] %vm162, %v316
        %v334 = vld [vmem:[%s132 + $0x1] sm:$0xff]
        %v335 = vld [vmem:[%s132 + $0x9] sm:$0x3f]
        %v336 = vld [vmem:[%s132 + $0x11] sm:$0xff]
        %v337 = vld [vmem:[%s132 + $0x19] sm:$0x3f]
        %v338 = vld [vmem:[%s132 + $0x21] sm:$0xff]
        %v339 = vld [vmem:[%s132 + $0x29] sm:$0x3f]
        %v340 = vld [vmem:[%s132 + $0x31] sm:$0xff]
        %v341 = vld [vmem:[%s132 + $0x39] sm:$0x3f]
        %350 = vrot.lane.b32.xlu0 %v334, 126
        %v351 = vpop.permute.xlu0 %350
        %352 = vrot.lane.b32.xlu0 %v335, 126
        %v353 = vpop.permute.xlu0 %352
        %354 = vrot.lane.b32.xlu0 %v336, 126
        %v355 = vpop.permute.xlu0 %354
        %356 = vrot.lane.b32.xlu0 %v337, 126
        %v357 = vpop.permute.xlu0 %356
        %358 = vrot.lane.b32.xlu0 %v338, 126
        %v359 = vpop.permute.xlu0 %358
        %360 = vrot.lane.b32.xlu0 %v339, 126
        %v361 = vpop.permute.xlu0 %360
        %362 = vrot.lane.b32.xlu0 %v340, 126
        %v363 = vpop.permute.xlu0 %362
        %364 = vrot.lane.b32.xlu0 %v341, 126
        %v365 = vpop.permute.xlu0 %364
        %s374 = scalar_lea.vmem %s149, 320 [#allocation4]
        %375 = vst.msk [vmem:[%s374] sm:$0xff] %vm160, %v351
        %376 = vst.msk [vmem:[%s374 + $0x8] sm:$0x3f] %vm162, %v353
        %377 = vst.msk [vmem:[%s374 + $0x10] sm:$0xff] %vm160, %v355
        %378 = vst.msk [vmem:[%s374 + $0x18] sm:$0x3f] %vm162, %v357
        %379 = vst.msk [vmem:[%s374 + $0x20] sm:$0xff] %vm160, %v359
        %380 = vst.msk [vmem:[%s374 + $0x28] sm:$0x3f] %vm162, %v361
        %381 = vst.msk [vmem:[%s374 + $0x30] sm:$0xff] %vm160, %v363
        %382 = vst.msk [vmem:[%s374 + $0x38] sm:$0x3f] %vm162, %v365
        %v383 = vld [vmem:[%s132 + $0x2] sm:$0xff]
        %v384 = vld [vmem:[%s132 + $0xa] sm:$0x3f]
        %v385 = vld [vmem:[%s132 + $0x12] sm:$0xff]
        %v386 = vld [vmem:[%s132 + $0x1a] sm:$0x3f]
        %v387 = vld [vmem:[%s132 + $0x22] sm:$0xff]
        %v388 = vld [vmem:[%s132 + $0x2a] sm:$0x3f]
        %v389 = vld [vmem:[%s132 + $0x32] sm:$0xff]
        %v390 = vld [vmem:[%s132 + $0x3a] sm:$0x3f]
        %s391 = scalar_lea.vmem %s149, 384 [#allocation4]
        %392 = vst.msk [vmem:[%s391] sm:$0xff] %vm160, %v383
        %393 = vst.msk [vmem:[%s391 + $0x8] sm:$0x3f] %vm162, %v384
        %394 = vst.msk [vmem:[%s391 + $0x10] sm:$0xff] %vm160, %v385
        %395 = vst.msk [vmem:[%s391 + $0x18] sm:$0x3f] %vm162, %v386
        %396 = vst.msk [vmem:[%s391 + $0x20] sm:$0xff] %vm160, %v387
        %397 = vst.msk [vmem:[%s391 + $0x28] sm:$0x3f] %vm162, %v388
        %398 = vst.msk [vmem:[%s391 + $0x30] sm:$0xff] %vm160, %v389
        %399 = vst.msk [vmem:[%s391 + $0x38] sm:$0x3f] %vm162, %v390
        %v400 = vld [vmem:[%s132 + $0x2] sm:$0xff]
        %v401 = vld [vmem:[%s132 + $0xa] sm:$0x3f]
        %v402 = vld [vmem:[%s132 + $0x12] sm:$0xff]
        %v403 = vld [vmem:[%s132 + $0x1a] sm:$0x3f]
        %v404 = vld [vmem:[%s132 + $0x22] sm:$0xff]
        %v405 = vld [vmem:[%s132 + $0x2a] sm:$0x3f]
        %v406 = vld [vmem:[%s132 + $0x32] sm:$0xff]
        %v407 = vld [vmem:[%s132 + $0x3a] sm:$0x3f]
        %416 = vrot.lane.b32.xlu0 %v400, 127
        %v417 = vpop.permute.xlu0 %416
        %418 = vrot.lane.b32.xlu0 %v401, 127
        %v419 = vpop.permute.xlu0 %418
        %420 = vrot.lane.b32.xlu0 %v402, 127
        %v421 = vpop.permute.xlu0 %420
        %422 = vrot.lane.b32.xlu0 %v403, 127
        %v423 = vpop.permute.xlu0 %422
        %424 = vrot.lane.b32.xlu0 %v404, 127
        %v425 = vpop.permute.xlu0 %424
        %426 = vrot.lane.b32.xlu0 %v405, 127
        %v427 = vpop.permute.xlu0 %426
        %428 = vrot.lane.b32.xlu0 %v406, 127
        %v429 = vpop.permute.xlu0 %428
        %430 = vrot.lane.b32.xlu0 %v407, 127
        %v431 = vpop.permute.xlu0 %430
        %s440 = scalar_lea.vmem %s149, 448 [#allocation4]
        %441 = vst.msk [vmem:[%s440] sm:$0xff] %vm160, %v417
        %442 = vst.msk [vmem:[%s440 + $0x8] sm:$0x3f] %vm162, %v419
        %443 = vst.msk [vmem:[%s440 + $0x10] sm:$0xff] %vm160, %v421
        %444 = vst.msk [vmem:[%s440 + $0x18] sm:$0x3f] %vm162, %v423
        %445 = vst.msk [vmem:[%s440 + $0x20] sm:$0xff] %vm160, %v425
        %446 = vst.msk [vmem:[%s440 + $0x28] sm:$0x3f] %vm162, %v427
        %447 = vst.msk [vmem:[%s440 + $0x30] sm:$0xff] %vm160, %v429
        %448 = vst.msk [vmem:[%s440 + $0x38] sm:$0x3f] %vm162, %v431
        %v449 = vld [vmem:[%s132 + $0x2] sm:$0xff]
        %v450 = vld [vmem:[%s132 + $0xa] sm:$0x3f]
        %v451 = vld [vmem:[%s132 + $0x12] sm:$0xff]
        %v452 = vld [vmem:[%s132 + $0x1a] sm:$0x3f]
        %v453 = vld [vmem:[%s132 + $0x22] sm:$0xff]
        %v454 = vld [vmem:[%s132 + $0x2a] sm:$0x3f]
        %v455 = vld [vmem:[%s132 + $0x32] sm:$0xff]
        %v456 = vld [vmem:[%s132 + $0x3a] sm:$0x3f]
        %465 = vrot.lane.b32.xlu0 %v449, 126
        %v466 = vpop.permute.xlu0 %465
        %467 = vrot.lane.b32.xlu0 %v450, 126
        %v468 = vpop.permute.xlu0 %467
        %469 = vrot.lane.b32.xlu0 %v451, 126
        %v470 = vpop.permute.xlu0 %469
        %471 = vrot.lane.b32.xlu0 %v452, 126
        %v472 = vpop.permute.xlu0 %471
        %473 = vrot.lane.b32.xlu0 %v453, 126
        %v474 = vpop.permute.xlu0 %473
        %475 = vrot.lane.b32.xlu0 %v454, 126
        %v476 = vpop.permute.xlu0 %475
        %477 = vrot.lane.b32.xlu0 %v455, 126
        %v478 = vpop.permute.xlu0 %477
        %479 = vrot.lane.b32.xlu0 %v456, 126
        %v480 = vpop.permute.xlu0 %479
        %s489 = scalar_lea.vmem %s149, 512 [#allocation4]
        %490 = vst.msk [vmem:[%s489] sm:$0xff] %vm160, %v466
        %491 = vst.msk [vmem:[%s489 + $0x8] sm:$0x3f] %vm162, %v468
        %492 = vst.msk [vmem:[%s489 + $0x10] sm:$0xff] %vm160, %v470
        %493 = vst.msk [vmem:[%s489 + $0x18] sm:$0x3f] %vm162, %v472
        %494 = vst.msk [vmem:[%s489 + $0x20] sm:$0xff] %vm160, %v474
        %495 = vst.msk [vmem:[%s489 + $0x28] sm:$0x3f] %vm162, %v476
        %496 = vst.msk [vmem:[%s489 + $0x30] sm:$0xff] %vm160, %v478
        %497 = vst.msk [vmem:[%s489 + $0x38] sm:$0x3f] %vm162, %v480
        %s498 = sand.u32 %s65, 1
        %s499 = sand.u32 %s65, 1
        %s500 = smul.addr %s499, 576
        %s501 = scalar_lea.vmem [#allocation4], %s500
        // Predicated region
        $region29: #{tpu_custom_call.1} parent=23 // pred_check
          %p502 = pneg %p75
        $region30: #{tpu_custom_call.1} parent=23 // pred_check_branch
          %504 = sbr.rel (%p502) target = $region32
        $region31: #{tpu_custom_call.1} parent=23 // pred_region
          %s505 = smul.u32 4, %s20
          %s506 = smul.addr %s505, 2
          %s507 = smul.addr %s19, 8
          %s508 = sadd.s32 %s506, %s507
          %s509 = smul.addr %s508, 8
          %s510 = scalar_lea.vmem %s1, %s509
          // Predicated region
          $region33: #{tpu_custom_call.1} parent=31 // pred_check
            _
          $region34: #{tpu_custom_call.1} parent=31 // pred_check_branch
            %512 = sbr.rel (0) target = $region36
          $region35: #{tpu_custom_call.1} parent=31 // pred_region
            // Predicated region
            $region37: #{tpu_custom_call.1} parent=35 // pred_check
              _
            $region38: #{tpu_custom_call.1} parent=35 // pred_check_branch
              %514 = sbr.rel (0) target = $region40
            $region39: #{tpu_custom_call.1} parent=35 // pred_region
              // Predicated region
              $region52: #{tpu_custom_call.1} parent=39 // pred_check
                _
              $region53: #{tpu_custom_call.1} parent=39 // pred_check_branch
                %671 = sbr.rel (0) target = $region55
              $region54: #{tpu_custom_call.1} parent=39 // pred_region
                loop: start=0, step=1, limit=1
                $region56: #{tpu_custom_call.1} parent=54 // loop_pre_header
                  _
                $region57: #{tpu_custom_call.1} parent=54 // loop_header
                  %s673 = sphi 0, %s677
                  %p674 = scmp.ge.s32.totalorder %s673, 1
                  %s678 = sphi %s501, %s501
                  %s679 = sphi %s510, %s510
                $region58: #{tpu_custom_call.1} parent=54 // loop_header_branch
                  %676 = sbr.rel (%p674) target = $region62
                $region59: #{tpu_custom_call.1} parent=54 // loop_body
                  %v680 = vld [vmem:[%s678] sm:$0xff]
                  %681 = vst [vmem:[%s679] sm:$0xff] %v680
                  %v682 = vld [vmem:[%s678 + $0x8] sm:$0xff]
                  %683 = vst [vmem:[%s679 + $0x8] sm:$0xff] %v682
                  %v684 = vld [vmem:[%s678 + $0x10] sm:$0xff]
                  %685 = vst [vmem:[%s679 + $0x10] sm:$0xff] %v684
                  %v686 = vld [vmem:[%s678 + $0x18] sm:$0xff]
                  %687 = vst [vmem:[%s679 + $0x18] sm:$0xff] %v686
                  %v688 = vld [vmem:[%s678 + $0x20] sm:$0xff]
                  %689 = vst [vmem:[%s679 + $0x20] sm:$0xff] %v688
                  %v690 = vld [vmem:[%s678 + $0x28] sm:$0xff]
                  %691 = vst [vmem:[%s679 + $0x28] sm:$0xff] %v690
                  %v692 = vld [vmem:[%s678 + $0x30] sm:$0xff]
                  %693 = vst [vmem:[%s679 + $0x30] sm:$0xff] %v692
                  %v694 = vld [vmem:[%s678 + $0x38] sm:$0xff]
                  %695 = vst [vmem:[%s679 + $0x38] sm:$0xff] %v694
                  %v696 = vld [vmem:[%s678 + $0x40] sm:$0xff]
                  %697 = vst [vmem:[%s679 + $0x80] sm:$0xff] %v696
                  %v698 = vld [vmem:[%s678 + $0x48] sm:$0xff]
                  %699 = vst [vmem:[%s679 + $0x88] sm:$0xff] %v698
                  %v700 = vld [vmem:[%s678 + $0x50] sm:$0xff]
                  %701 = vst [vmem:[%s679 + $0x90] sm:$0xff] %v700
                  %v702 = vld [vmem:[%s678 + $0x58] sm:$0xff]
                  %703 = vst [vmem:[%s679 + $0x98] sm:$0xff] %v702
                  %v704 = vld [vmem:[%s678 + $0x60] sm:$0xff]
                  %705 = vst [vmem:[%s679 + $0xa0] sm:$0xff] %v704
                  %v706 = vld [vmem:[%s678 + $0x68] sm:$0xff]
                  %707 = vst [vmem:[%s679 + $0xa8] sm:$0xff] %v706
                  %v708 = vld [vmem:[%s678 + $0x70] sm:$0xff]
                  %709 = vst [vmem:[%s679 + $0xb0] sm:$0xff] %v708
                  %v710 = vld [vmem:[%s678 + $0x78] sm:$0xff]
                  %711 = vst [vmem:[%s679 + $0xb8] sm:$0xff] %v710
                  %v712 = vld [vmem:[%s678 + $0x80] sm:$0xff]
                  %713 = vst [vmem:[%s679 + $0x100] sm:$0xff] %v712
                  %v714 = vld [vmem:[%s678 + $0x88] sm:$0xff]
                  %715 = vst [vmem:[%s679 + $0x108] sm:$0xff] %v714
                  %v716 = vld [vmem:[%s678 + $0x90] sm:$0xff]
                  %717 = vst [vmem:[%s679 + $0x110] sm:$0xff] %v716
                  %v718 = vld [vmem:[%s678 + $0x98] sm:$0xff]
                  %719 = vst [vmem:[%s679 + $0x118] sm:$0xff] %v718
                  %v720 = vld [vmem:[%s678 + $0xa0] sm:$0xff]
                  %721 = vst [vmem:[%s679 + $0x120] sm:$0xff] %v720
                  %v722 = vld [vmem:[%s678 + $0xa8] sm:$0xff]
                  %723 = vst [vmem:[%s679 + $0x128] sm:$0xff] %v722
                  %v724 = vld [vmem:[%s678 + $0xb0] sm:$0xff]
                  %725 = vst [vmem:[%s679 + $0x130] sm:$0xff] %v724
                  %v726 = vld [vmem:[%s678 + $0xb8] sm:$0xff]
                  %727 = vst [vmem:[%s679 + $0x138] sm:$0xff] %v726
                  %v728 = vld [vmem:[%s678 + $0xc0] sm:$0xff]
                  %729 = vst [vmem:[%s679 + $0x180] sm:$0xff] %v728
                  %v730 = vld [vmem:[%s678 + $0xc8] sm:$0xff]
                  %731 = vst [vmem:[%s679 + $0x188] sm:$0xff] %v730
                  %v732 = vld [vmem:[%s678 + $0xd0] sm:$0xff]
                  %733 = vst [vmem:[%s679 + $0x190] sm:$0xff] %v732
                  %v734 = vld [vmem:[%s678 + $0xd8] sm:$0xff]
                  %735 = vst [vmem:[%s679 + $0x198] sm:$0xff] %v734
                  %v736 = vld [vmem:[%s678 + $0xe0] sm:$0xff]
                  %737 = vst [vmem:[%s679 + $0x1a0] sm:$0xff] %v736
                  %v738 = vld [vmem:[%s678 + $0xe8] sm:$0xff]
                  %739 = vst [vmem:[%s679 + $0x1a8] sm:$0xff] %v738
                  %v740 = vld [vmem:[%s678 + $0xf0] sm:$0xff]
                  %741 = vst [vmem:[%s679 + $0x1b0] sm:$0xff] %v740
                  %v742 = vld [vmem:[%s678 + $0xf8] sm:$0xff]
                  %743 = vst [vmem:[%s679 + $0x1b8] sm:$0xff] %v742
                  %v744 = vld [vmem:[%s678 + $0x100] sm:$0xff]
                  %745 = vst [vmem:[%s679 + $0x200] sm:$0xff] %v744
                  %v746 = vld [vmem:[%s678 + $0x108] sm:$0xff]
                  %747 = vst [vmem:[%s679 + $0x208] sm:$0xff] %v746
                  %v748 = vld [vmem:[%s678 + $0x110] sm:$0xff]
                  %749 = vst [vmem:[%s679 + $0x210] sm:$0xff] %v748
                  %v750 = vld [vmem:[%s678 + $0x118] sm:$0xff]
                  %751 = vst [vmem:[%s679 + $0x218] sm:$0xff] %v750
                  %v752 = vld [vmem:[%s678 + $0x120] sm:$0xff]
                  %753 = vst [vmem:[%s679 + $0x220] sm:$0xff] %v752
                  %v754 = vld [vmem:[%s678 + $0x128] sm:$0xff]
                  %755 = vst [vmem:[%s679 + $0x228] sm:$0xff] %v754
                  %v756 = vld [vmem:[%s678 + $0x130] sm:$0xff]
                  %757 = vst [vmem:[%s679 + $0x230] sm:$0xff] %v756
                  %v758 = vld [vmem:[%s678 + $0x138] sm:$0xff]
                  %759 = vst [vmem:[%s679 + $0x238] sm:$0xff] %v758
                  %v760 = vld [vmem:[%s678 + $0x140] sm:$0xff]
                  %761 = vst [vmem:[%s679 + $0x280] sm:$0xff] %v760
                  %v762 = vld [vmem:[%s678 + $0x148] sm:$0xff]
                  %763 = vst [vmem:[%s679 + $0x288] sm:$0xff] %v762
                  %v764 = vld [vmem:[%s678 + $0x150] sm:$0xff]
                  %765 = vst [vmem:[%s679 + $0x290] sm:$0xff] %v764
                  %v766 = vld [vmem:[%s678 + $0x158] sm:$0xff]
                  %767 = vst [vmem:[%s679 + $0x298] sm:$0xff] %v766
                  %v768 = vld [vmem:[%s678 + $0x160] sm:$0xff]
                  %769 = vst [vmem:[%s679 + $0x2a0] sm:$0xff] %v768
                  %v770 = vld [vmem:[%s678 + $0x168] sm:$0xff]
                  %771 = vst [vmem:[%s679 + $0x2a8] sm:$0xff] %v770
                  %v772 = vld [vmem:[%s678 + $0x170] sm:$0xff]
                  %773 = vst [vmem:[%s679 + $0x2b0] sm:$0xff] %v772
                  %v774 = vld [vmem:[%s678 + $0x178] sm:$0xff]
                  %775 = vst [vmem:[%s679 + $0x2b8] sm:$0xff] %v774
                  %v776 = vld [vmem:[%s678 + $0x180] sm:$0xff]
                  %777 = vst [vmem:[%s679 + $0x300] sm:$0xff] %v776
                  %v778 = vld [vmem:[%s678 + $0x188] sm:$0xff]
                  %779 = vst [vmem:[%s679 + $0x308] sm:$0xff] %v778
                  %v780 = vld [vmem:[%s678 + $0x190] sm:$0xff]
                  %781 = vst [vmem:[%s679 + $0x310] sm:$0xff] %v780
                  %v782 = vld [vmem:[%s678 + $0x198] sm:$0xff]
                  %783 = vst [vmem:[%s679 + $0x318] sm:$0xff] %v782
                  %v784 = vld [vmem:[%s678 + $0x1a0] sm:$0xff]
                  %785 = vst [vmem:[%s679 + $0x320] sm:$0xff] %v784
                  %v786 = vld [vmem:[%s678 + $0x1a8] sm:$0xff]
                  %787 = vst [vmem:[%s679 + $0x328] sm:$0xff] %v786
                  %v788 = vld [vmem:[%s678 + $0x1b0] sm:$0xff]
                  %789 = vst [vmem:[%s679 + $0x330] sm:$0xff] %v788
                  %v790 = vld [vmem:[%s678 + $0x1b8] sm:$0xff]
                  %791 = vst [vmem:[%s679 + $0x338] sm:$0xff] %v790
                  %v792 = vld [vmem:[%s678 + $0x1c0] sm:$0xff]
                  %793 = vst [vmem:[%s679 + $0x380] sm:$0xff] %v792
                  %v794 = vld [vmem:[%s678 + $0x1c8] sm:$0xff]
                  %795 = vst [vmem:[%s679 + $0x388] sm:$0xff] %v794
                  %v796 = vld [vmem:[%s678 + $0x1d0] sm:$0xff]
                  %797 = vst [vmem:[%s679 + $0x390] sm:$0xff] %v796
                  %v798 = vld [vmem:[%s678 + $0x1d8] sm:$0xff]
                  %799 = vst [vmem:[%s679 + $0x398] sm:$0xff] %v798
                  %v800 = vld [vmem:[%s678 + $0x1e0] sm:$0xff]
                  %801 = vst [vmem:[%s679 + $0x3a0] sm:$0xff] %v800
                  %v802 = vld [vmem:[%s678 + $0x1e8] sm:$0xff]
                  %803 = vst [vmem:[%s679 + $0x3a8] sm:$0xff] %v802
                  %v804 = vld [vmem:[%s678 + $0x1f0] sm:$0xff]
                  %805 = vst [vmem:[%s679 + $0x3b0] sm:$0xff] %v804
                  %v806 = vld [vmem:[%s678 + $0x1f8] sm:$0xff]
                  %807 = vst [vmem:[%s679 + $0x3b8] sm:$0xff] %v806
                  %v808 = vld [vmem:[%s678 + $0x200] sm:$0xff]
                  %809 = vst [vmem:[%s679 + $0x400] sm:$0xff] %v808
                  %v810 = vld [vmem:[%s678 + $0x208] sm:$0xff]
                  %811 = vst [vmem:[%s679 + $0x408] sm:$0xff] %v810
                  %v812 = vld [vmem:[%s678 + $0x210] sm:$0xff]
                  %813 = vst [vmem:[%s679 + $0x410] sm:$0xff] %v812
                  %v814 = vld [vmem:[%s678 + $0x218] sm:$0xff]
                  %815 = vst [vmem:[%s679 + $0x418] sm:$0xff] %v814
                  %v816 = vld [vmem:[%s678 + $0x220] sm:$0xff]
                  %817 = vst [vmem:[%s679 + $0x420] sm:$0xff] %v816
                  %v818 = vld [vmem:[%s678 + $0x228] sm:$0xff]
                  %819 = vst [vmem:[%s679 + $0x428] sm:$0xff] %v818
                  %v820 = vld [vmem:[%s678 + $0x230] sm:$0xff]
                  %821 = vst [vmem:[%s679 + $0x430] sm:$0xff] %v820
                  %v822 = vld [vmem:[%s678 + $0x238] sm:$0xff]
                  %823 = vst [vmem:[%s679 + $0x438] sm:$0xff] %v822
                $region60: #{tpu_custom_call.1} parent=54 // loop_footer
                  %s677 = sadd.s32 1, %s673
                $region61: #{tpu_custom_call.1} parent=54 // loop_footer_branch
                  %672 = sbr.rel target = $region57
                $region62: #{tpu_custom_call.1} parent=54 // loop_exit
                  _
              $region55: #{tpu_custom_call.1} parent=39 // pred_fallthru
                _
              // Predicated region
              $region63: #{tpu_custom_call.1} parent=39 // pred_check
                _
              $region64: #{tpu_custom_call.1} parent=39 // pred_check_branch
                %825 = sbr.rel target = $region66
              $region65: #{tpu_custom_call.1} parent=39 // pred_region
                _
              $region66: #{tpu_custom_call.1} parent=39 // pred_fallthru
                _
            $region40: #{tpu_custom_call.1} parent=35 // pred_fallthru
              _
            // Predicated region
            $region41: #{tpu_custom_call.1} parent=35 // pred_check
              _
            $region42: #{tpu_custom_call.1} parent=35 // pred_check_branch
              %516 = sbr.rel target = $region44
            $region43: #{tpu_custom_call.1} parent=35 // pred_region
              loop: start=0, step=1, limit=1
              $region45: #{tpu_custom_call.1} parent=43 // loop_pre_header
                _
              $region46: #{tpu_custom_call.1} parent=43 // loop_header
                %s519 = sphi 0, %s523
                %p520 = scmp.ge.s32.totalorder %s519, 1
                %s524 = sphi %s501, %s501
                %s525 = sphi %s510, %s510
              $region47: #{tpu_custom_call.1} parent=43 // loop_header_branch
                %522 = sbr.rel (%p520) target = $region51
              $region48: #{tpu_custom_call.1} parent=43 // loop_body
                %v526 = vld [vmem:[%s524] sm:$0xff]
                %527 = vst [vmem:[%s525] sm:$0xff] %v526
                %v528 = vld [vmem:[%s524 + $0x8] sm:$0xff]
                %529 = vst [vmem:[%s525 + $0x8] sm:$0xff] %v528
                %v530 = vld [vmem:[%s524 + $0x10] sm:$0xff]
                %531 = vst [vmem:[%s525 + $0x10] sm:$0xff] %v530
                %v532 = vld [vmem:[%s524 + $0x18] sm:$0xff]
                %533 = vst [vmem:[%s525 + $0x18] sm:$0xff] %v532
                %v534 = vld [vmem:[%s524 + $0x20] sm:$0xff]
                %535 = vst [vmem:[%s525 + $0x20] sm:$0xff] %v534
                %v536 = vld [vmem:[%s524 + $0x28] sm:$0xff]
                %537 = vst [vmem:[%s525 + $0x28] sm:$0xff] %v536
                %v538 = vld [vmem:[%s524 + $0x30] sm:$0xff]
                %539 = vst [vmem:[%s525 + $0x30] sm:$0xff] %v538
                %v540 = vld [vmem:[%s524 + $0x38] sm:$0xff]
                %541 = vst [vmem:[%s525 + $0x38] sm:$0xff] %v540
                %v542 = vld [vmem:[%s524 + $0x40] sm:$0xff]
                %543 = vst [vmem:[%s525 + $0x80] sm:$0xff] %v542
                %v544 = vld [vmem:[%s524 + $0x48] sm:$0xff]
                %545 = vst [vmem:[%s525 + $0x88] sm:$0xff] %v544
                %v546 = vld [vmem:[%s524 + $0x50] sm:$0xff]
                %547 = vst [vmem:[%s525 + $0x90] sm:$0xff] %v546
                %v548 = vld [vmem:[%s524 + $0x58] sm:$0xff]
                %549 = vst [vmem:[%s525 + $0x98] sm:$0xff] %v548
                %v550 = vld [vmem:[%s524 + $0x60] sm:$0xff]
                %551 = vst [vmem:[%s525 + $0xa0] sm:$0xff] %v550
                %v552 = vld [vmem:[%s524 + $0x68] sm:$0xff]
                %553 = vst [vmem:[%s525 + $0xa8] sm:$0xff] %v552
                %v554 = vld [vmem:[%s524 + $0x70] sm:$0xff]
                %555 = vst [vmem:[%s525 + $0xb0] sm:$0xff] %v554
                %v556 = vld [vmem:[%s524 + $0x78] sm:$0xff]
                %557 = vst [vmem:[%s525 + $0xb8] sm:$0xff] %v556
                %v558 = vld [vmem:[%s524 + $0x80] sm:$0xff]
                %559 = vst [vmem:[%s525 + $0x100] sm:$0xff] %v558
                %v560 = vld [vmem:[%s524 + $0x88] sm:$0xff]
                %561 = vst [vmem:[%s525 + $0x108] sm:$0xff] %v560
                %v562 = vld [vmem:[%s524 + $0x90] sm:$0xff]
                %563 = vst [vmem:[%s525 + $0x110] sm:$0xff] %v562
                %v564 = vld [vmem:[%s524 + $0x98] sm:$0xff]
                %565 = vst [vmem:[%s525 + $0x118] sm:$0xff] %v564
                %v566 = vld [vmem:[%s524 + $0xa0] sm:$0xff]
                %567 = vst [vmem:[%s525 + $0x120] sm:$0xff] %v566
                %v568 = vld [vmem:[%s524 + $0xa8] sm:$0xff]
                %569 = vst [vmem:[%s525 + $0x128] sm:$0xff] %v568
                %v570 = vld [vmem:[%s524 + $0xb0] sm:$0xff]
                %571 = vst [vmem:[%s525 + $0x130] sm:$0xff] %v570
                %v572 = vld [vmem:[%s524 + $0xb8] sm:$0xff]
                %573 = vst [vmem:[%s525 + $0x138] sm:$0xff] %v572
                %v574 = vld [vmem:[%s524 + $0xc0] sm:$0xff]
                %575 = vst [vmem:[%s525 + $0x180] sm:$0xff] %v574
                %v576 = vld [vmem:[%s524 + $0xc8] sm:$0xff]
                %577 = vst [vmem:[%s525 + $0x188] sm:$0xff] %v576
                %v578 = vld [vmem:[%s524 + $0xd0] sm:$0xff]
                %579 = vst [vmem:[%s525 + $0x190] sm:$0xff] %v578
                %v580 = vld [vmem:[%s524 + $0xd8] sm:$0xff]
                %581 = vst [vmem:[%s525 + $0x198] sm:$0xff] %v580
                %v582 = vld [vmem:[%s524 + $0xe0] sm:$0xff]
                %583 = vst [vmem:[%s525 + $0x1a0] sm:$0xff] %v582
                %v584 = vld [vmem:[%s524 + $0xe8] sm:$0xff]
                %585 = vst [vmem:[%s525 + $0x1a8] sm:$0xff] %v584
                %v586 = vld [vmem:[%s524 + $0xf0] sm:$0xff]
                %587 = vst [vmem:[%s525 + $0x1b0] sm:$0xff] %v586
                %v588 = vld [vmem:[%s524 + $0xf8] sm:$0xff]
                %589 = vst [vmem:[%s525 + $0x1b8] sm:$0xff] %v588
                %v590 = vld [vmem:[%s524 + $0x100] sm:$0xff]
                %591 = vst [vmem:[%s525 + $0x200] sm:$0xff] %v590
                %v592 = vld [vmem:[%s524 + $0x108] sm:$0xff]
                %593 = vst [vmem:[%s525 + $0x208] sm:$0xff] %v592
                %v594 = vld [vmem:[%s524 + $0x110] sm:$0xff]
                %595 = vst [vmem:[%s525 + $0x210] sm:$0xff] %v594
                %v596 = vld [vmem:[%s524 + $0x118] sm:$0xff]
                %597 = vst [vmem:[%s525 + $0x218] sm:$0xff] %v596
                %v598 = vld [vmem:[%s524 + $0x120] sm:$0xff]
                %599 = vst [vmem:[%s525 + $0x220] sm:$0xff] %v598
                %v600 = vld [vmem:[%s524 + $0x128] sm:$0xff]
                %601 = vst [vmem:[%s525 + $0x228] sm:$0xff] %v600
                %v602 = vld [vmem:[%s524 + $0x130] sm:$0xff]
                %603 = vst [vmem:[%s525 + $0x230] sm:$0xff] %v602
                %v604 = vld [vmem:[%s524 + $0x138] sm:$0xff]
                %605 = vst [vmem:[%s525 + $0x238] sm:$0xff] %v604
                %v606 = vld [vmem:[%s524 + $0x140] sm:$0xff]
                %607 = vst [vmem:[%s525 + $0x280] sm:$0xff] %v606
                %v608 = vld [vmem:[%s524 + $0x148] sm:$0xff]
                %609 = vst [vmem:[%s525 + $0x288] sm:$0xff] %v608
                %v610 = vld [vmem:[%s524 + $0x150] sm:$0xff]
                %611 = vst [vmem:[%s525 + $0x290] sm:$0xff] %v610
                %v612 = vld [vmem:[%s524 + $0x158] sm:$0xff]
                %613 = vst [vmem:[%s525 + $0x298] sm:$0xff] %v612
                %v614 = vld [vmem:[%s524 + $0x160] sm:$0xff]
                %615 = vst [vmem:[%s525 + $0x2a0] sm:$0xff] %v614
                %v616 = vld [vmem:[%s524 + $0x168] sm:$0xff]
                %617 = vst [vmem:[%s525 + $0x2a8] sm:$0xff] %v616
                %v618 = vld [vmem:[%s524 + $0x170] sm:$0xff]
                %619 = vst [vmem:[%s525 + $0x2b0] sm:$0xff] %v618
                %v620 = vld [vmem:[%s524 + $0x178] sm:$0xff]
                %621 = vst [vmem:[%s525 + $0x2b8] sm:$0xff] %v620
                %v622 = vld [vmem:[%s524 + $0x180] sm:$0xff]
                %623 = vst [vmem:[%s525 + $0x300] sm:$0xff] %v622
                %v624 = vld [vmem:[%s524 + $0x188] sm:$0xff]
                %625 = vst [vmem:[%s525 + $0x308] sm:$0xff] %v624
                %v626 = vld [vmem:[%s524 + $0x190] sm:$0xff]
                %627 = vst [vmem:[%s525 + $0x310] sm:$0xff] %v626
                %v628 = vld [vmem:[%s524 + $0x198] sm:$0xff]
                %629 = vst [vmem:[%s525 + $0x318] sm:$0xff] %v628
                %v630 = vld [vmem:[%s524 + $0x1a0] sm:$0xff]
                %631 = vst [vmem:[%s525 + $0x320] sm:$0xff] %v630
                %v632 = vld [vmem:[%s524 + $0x1a8] sm:$0xff]
                %633 = vst [vmem:[%s525 + $0x328] sm:$0xff] %v632
                %v634 = vld [vmem:[%s524 + $0x1b0] sm:$0xff]
                %635 = vst [vmem:[%s525 + $0x330] sm:$0xff] %v634
                %v636 = vld [vmem:[%s524 + $0x1b8] sm:$0xff]
                %637 = vst [vmem:[%s525 + $0x338] sm:$0xff] %v636
                %v638 = vld [vmem:[%s524 + $0x1c0] sm:$0xff]
                %639 = vst [vmem:[%s525 + $0x380] sm:$0xff] %v638
                %v640 = vld [vmem:[%s524 + $0x1c8] sm:$0xff]
                %641 = vst [vmem:[%s525 + $0x388] sm:$0xff] %v640
                %v642 = vld [vmem:[%s524 + $0x1d0] sm:$0xff]
                %643 = vst [vmem:[%s525 + $0x390] sm:$0xff] %v642
                %v644 = vld [vmem:[%s524 + $0x1d8] sm:$0xff]
                %645 = vst [vmem:[%s525 + $0x398] sm:$0xff] %v644
                %v646 = vld [vmem:[%s524 + $0x1e0] sm:$0xff]
                %647 = vst [vmem:[%s525 + $0x3a0] sm:$0xff] %v646
                %v648 = vld [vmem:[%s524 + $0x1e8] sm:$0xff]
                %649 = vst [vmem:[%s525 + $0x3a8] sm:$0xff] %v648
                %v650 = vld [vmem:[%s524 + $0x1f0] sm:$0xff]
                %651 = vst [vmem:[%s525 + $0x3b0] sm:$0xff] %v650
                %v652 = vld [vmem:[%s524 + $0x1f8] sm:$0xff]
                %653 = vst [vmem:[%s525 + $0x3b8] sm:$0xff] %v652
                %v654 = vld [vmem:[%s524 + $0x200] sm:$0xff]
                %655 = vst [vmem:[%s525 + $0x400] sm:$0xff] %v654
                %v656 = vld [vmem:[%s524 + $0x208] sm:$0xff]
                %657 = vst [vmem:[%s525 + $0x408] sm:$0xff] %v656
                %v658 = vld [vmem:[%s524 + $0x210] sm:$0xff]
                %659 = vst [vmem:[%s525 + $0x410] sm:$0xff] %v658
                %v660 = vld [vmem:[%s524 + $0x218] sm:$0xff]
                %661 = vst [vmem:[%s525 + $0x418] sm:$0xff] %v660
                %v662 = vld [vmem:[%s524 + $0x220] sm:$0xff]
                %663 = vst [vmem:[%s525 + $0x420] sm:$0xff] %v662
                %v664 = vld [vmem:[%s524 + $0x228] sm:$0xff]
                %665 = vst [vmem:[%s525 + $0x428] sm:$0xff] %v664
                %v666 = vld [vmem:[%s524 + $0x230] sm:$0xff]
                %667 = vst [vmem:[%s525 + $0x430] sm:$0xff] %v666
                %v668 = vld [vmem:[%s524 + $0x238] sm:$0xff]
                %669 = vst [vmem:[%s525 + $0x438] sm:$0xff] %v668
              $region49: #{tpu_custom_call.1} parent=43 // loop_footer
                %s523 = sadd.s32 1, %s519
              $region50: #{tpu_custom_call.1} parent=43 // loop_footer_branch
                %518 = sbr.rel target = $region46
              $region51: #{tpu_custom_call.1} parent=43 // loop_exit
                _
            $region44: #{tpu_custom_call.1} parent=35 // pred_fallthru
              _
          $region36: #{tpu_custom_call.1} parent=31 // pred_fallthru
            _
          %826 = vnop
        $region32: #{tpu_custom_call.1} parent=23 // pred_fallthru
          _
      $region24: #{tpu_custom_call.1} parent=5 // pred_fallthru
        _
      %p827 = scmp.le.s32.totalorder 2, %s10
      // Predicated region
      $region67: #{tpu_custom_call.1} parent=5 // pred_check
        %p828 = pneg %p827
      $region68: #{tpu_custom_call.1} parent=5 // pred_check_branch
        %830 = sbr.rel (%p828) target = $region70
      $region69: #{tpu_custom_call.1} parent=5 // pred_region
        %s831 = ssub.s32 %s10, 2
        // Predicated region
        $region71: #{tpu_custom_call.1} parent=69 // pred_check
          %p832 = pneg %p81
        $region72: #{tpu_custom_call.1} parent=69 // pred_check_branch
          %834 = sbr.rel (%p832) target = $region74
        $region73: #{tpu_custom_call.1} parent=69 // pred_region
          %s835 = sand.u32 %s66, 1
          %s836 = sand.u32 %s66, 1
          %s837 = smul.addr %s836, 576
          %s838 = scalar_lea.vmem [#allocation4], %s837
        $region74: #{tpu_custom_call.1} parent=69 // pred_fallthru
          _
      $region70: #{tpu_custom_call.1} parent=5 // pred_fallthru
        _
    $region6: #{tpu_custom_call.1} parent=1 // loop_footer
      %s14 = sadd.s32 1, %s10
    $region7: #{tpu_custom_call.1} parent=1 // loop_footer_branch
      %9 = sbr.rel target = $region3
    $region8: #{tpu_custom_call.1} parent=1 // loop_exit
      _
    %839 = vsyncpa [#allocation3], 1
    %s840 = scalar_lea.sflag [#allocation3], 1
    %841 = vsyncpa %s840, 1

</llo_original>
